<compile_context>
chip_gen: v6e
topology: v6e:2x2x1
jax: 0.10.0
libtpu: 0.0.40
codegen_flags: <defaults>
</compile_context>

<pallas_src>
import jax
import jax.numpy as jnp
from jax.experimental import pallas as pl
from jax.experimental.pallas import tpu as pltpu


def _round_up(x, m):
    return (x + m - 1) // m * m


# ---------------------------------------------------------------------------
# Conv-as-matmul kernels with fused per-tile BN partial statistics.
# A is the wrapper-side im2col matrix (rows = N*H*W pixels, K = 9*Cin taps).
# ---------------------------------------------------------------------------
def _conv_stats_kernel_k1(a_ref, w_ref, y_ref, stats_ref):
    """Single-K-tile specialization: no scratch accumulator round-trips.

    a_ref    : (TM, 128)  bf16 im2col rows
    w_ref    : (128, Cp)  bf16 weights
    y_ref    : (TM, Cp)   bf16 conv output tile
    stats_ref: (1, 8, Cp) f32 per-tile partials: row0 = sum, row1 = sum(x^2)
    """
    conv = jnp.dot(a_ref[...], w_ref[...], preferred_element_type=jnp.float32)
    y_ref[...] = conv.astype(y_ref.dtype)
    s1 = jnp.sum(conv, axis=0, keepdims=True)           # (1, Cp)
    s2 = jnp.sum(conv * conv, axis=0, keepdims=True)    # (1, Cp)
    pad = jnp.zeros((6, conv.shape[1]), jnp.float32)
    stats_ref[...] = jnp.concatenate([s1, s2, pad], axis=0)[None]


def _conv_stats_kernel_kn(a_ref, w_ref, y_ref, stats_ref, acc_ref):
    """General multi-K-tile path (reduction axis last, f32 VMEM accumulator)."""
    k = pl.program_id(1)
    part = jnp.dot(a_ref[...], w_ref[...], preferred_element_type=jnp.float32)

    @pl.when(k == 0)
    def _():
        acc_ref[...] = part

    @pl.when(k != 0)
    def _():
        acc_ref[...] += part

    @pl.when(k == pl.num_programs(1) - 1)
    def _():
        conv = acc_ref[...]
        y_ref[...] = conv.astype(y_ref.dtype)
        s1 = jnp.sum(conv, axis=0, keepdims=True)
        s2 = jnp.sum(conv * conv, axis=0, keepdims=True)
        pad = jnp.zeros((6, conv.shape[1]), jnp.float32)
        stats_ref[...] = jnp.concatenate([s1, s2, pad], axis=0)[None]


# ---------------------------------------------------------------------------
# One conv stage: Conv2d(3x3, pad=1) + per-channel batch statistics.
# ---------------------------------------------------------------------------
def conv3x3_stats(x_nhwc_bf16, w_hwio, *, tile_m=1024):
    """Returns (conv_flat (Rp, Cp) bf16, mean (Cout,) f32, var (Cout,) f32)."""
    N, H, W, Cin = x_nhwc_bf16.shape
    Cout = w_hwio.shape[-1]
    R, K = N * H * W, 9 * Cin
    Kp, Cp = _round_up(K, 128), _round_up(Cout, 128)

    # Row tile: as big as allowed (amortizes per-step overhead on single-TC
    # v5e/v6e) but keep >= 2 row tiles whenever possible so the "parallel"
    # axis can still split across v7x's two TensorCores.
    tm = min(tile_m, max(16, _round_up(pl.cdiv(R, 2), 16)))
    Rp = _round_up(R, tm)
    num_m, num_k = Rp // tm, Kp // 128

    # Wrapper-side im2col in bf16, materialized once with a single final pad.
    # TODO(synk): for deep-UNet stages where 9*Cin >> 128, replace the im2col
    # with a halo row-tiled conv kernel to avoid the 9x activation blow-up.
    xpad = jnp.pad(x_nhwc_bf16, ((0, 0), (1, 1), (1, 1), (0, 0)))
    cols = [xpad[:, dh:dh + H, dw:dw + W, :]
            for dh in range(3) for dw in range(3)]
    a = jnp.concatenate(cols, axis=-1).reshape(R, K)
    a = jnp.pad(a, ((0, Rp - R), (0, Kp - K)))                      # bf16
    wmat = jnp.pad(w_hwio.reshape(K, Cout).astype(jnp.bfloat16),
                   ((0, Kp - K), (0, Cp - Cout)))

    cost = pl.CostEstimate(
        flops=2 * Rp * Kp * Cp,
        transcendentals=0,
        bytes_accessed=(Rp * Kp * 2 + Kp * Cp * 2 + Rp * Cp * 2
                        + num_m * 8 * Cp * 4))

    out_shape = [
        jax.ShapeDtypeStruct((Rp, Cp), jnp.bfloat16),        # bf16 conv out
        jax.ShapeDtypeStruct((num_m, 8, Cp), jnp.float32),   # BN partials
    ]

    if num_k == 1:
        conv_flat, stats = pl.pallas_call(
            _conv_stats_kernel_k1,
            grid=(num_m,),
            in_specs=[
                pl.BlockSpec((tm, 128), lambda m: (m, 0)),
                pl.BlockSpec((128, Cp), lambda m: (0, 0)),
            ],
            out_specs=[
                pl.BlockSpec((tm, Cp), lambda m: (m, 0)),
                pl.BlockSpec((1, 8, Cp), lambda m: (m, 0, 0)),
            ],
            out_shape=out_shape,
            compiler_params=pltpu.CompilerParams(
                dimension_semantics=("parallel",),
                vmem_limit_bytes=32 * 1024 * 1024),
            cost_estimate=cost,
        )(a, wmat)
    else:
        conv_flat, stats = pl.pallas_call(
            _conv_stats_kernel_kn,
            grid=(num_m, num_k),
            in_specs=[
                pl.BlockSpec((tm, 128), lambda m, k: (m, k)),
                pl.BlockSpec((128, Cp), lambda m, k: (k, 0)),
            ],
            out_specs=[
                pl.BlockSpec((tm, Cp), lambda m, k: (m, 0)),
                pl.BlockSpec((1, 8, Cp), lambda m, k: (m, 0, 0)),
            ],
            out_shape=out_shape,
            scratch_shapes=[pltpu.VMEM((tm, Cp), jnp.float32)],
            compiler_params=pltpu.CompilerParams(
                dimension_semantics=("parallel", "arbitrary"),
                vmem_limit_bytes=32 * 1024 * 1024),
            cost_estimate=cost,
        )(a, wmat)

    # Finish BN statistics on the tiny per-tile partials (padded rows are 0).
    ssum = jnp.sum(stats[:, 0, :Cout], axis=0)
    ssq = jnp.sum(stats[:, 1, :Cout], axis=0)
    mean = ssum / R
    var = jnp.maximum(ssq / R - mean * mean, 0.0)   # biased (train-mode BN)
    # TODO(synk): E[x^2]-E[x]^2 in f32 can cancel for very large R/activations;
    # switch to shifted/Welford sums if this ever feeds real training.
    return conv_flat, mean, var


def _bn_relu(conv_flat, mean, var, gamma, beta, R, Cout, out_dtype):
    """Fold BN (batch stats) + ReLU; applied in the wrapper so XLA fuses it
    into the adjacent im2col / final-transpose pass (no extra HBM round-trip)."""
    scale = gamma * jax.lax.rsqrt(var + 1e-5)
    shift = beta - mean * scale
    y = conv_flat[:R, :Cout].astype(jnp.float32)
    y = jnp.maximum(y * scale[None, :] + shift[None, :], 0.0)
    return y.astype(out_dtype)


def double_conv(x_nchw, params):
    """Forward of DoubleConv. Input/output are NCHW (PyTorch convention)."""
    N, _, H, W = x_nchw.shape
    Cout1 = params["w1"].shape[-1]
    Cout2 = params["w2"].shape[-1]
    R = N * H * W

    # NCHW -> NHWC, cast to bf16 once (only feeds the bf16 matmul path).
    # TODO(synk): if embedded in a larger NHWC pipeline, drop the boundary
    # transposes (they are full HBM relayout passes).
    x = jnp.transpose(x_nchw, (0, 2, 3, 1)).astype(jnp.bfloat16)

    # Stage 1: Pallas conv + fused batch statistics.
    c1, m1, v1 = conv3x3_stats(x, params["w1"])
    # Stage-1 BN+ReLU folded into the stage-2 im2col wrapper pass (bf16).
    h1 = _bn_relu(c1, m1, v1, params["g1"], params["be1"], R, Cout1,
                  jnp.bfloat16).reshape(N, H, W, Cout1)

    # Stage 2: Pallas conv + fused batch statistics.
    c2, m2, v2 = conv3x3_stats(h1, params["w2"])
    # Stage-2 BN+ReLU folded into the final slice/reshape/transpose (f32).
    y = _bn_relu(c2, m2, v2, params["g2"], params["be2"], R, Cout2,
                 jnp.float32).reshape(N, H, W, Cout2)
    return jnp.transpose(y, (0, 3, 1, 2))                 # NHWC -> NCHW


# ---------------------------------------------------------------------------
# Pure-JAX reference (correctness check only; includes the conv bias, which is
# mathematically cancelled by train-mode BN mean subtraction).
# ---------------------------------------------------------------------------
def _ref_stage(x_nhwc, w_hwio, b, g, be):
    y = jax.lax.conv_general_dilated(
        x_nhwc, w_hwio, window_strides=(1, 1), padding="SAME",
        dimension_numbers=("NHWC", "HWIO", "NHWC"))
    y = y + b[None, None, None, :]
    mean = jnp.mean(y, axis=(0, 1, 2), keepdims=True)
    var = jnp.mean((y - mean) ** 2, axis=(0, 1, 2), keepdims=True)
    y = (y - mean) * jax.lax.rsqrt(var + 1e-5) * g[None, None, None, :] \
        + be[None, None, None, :]
    return jnp.maximum(y, 0.0)


def double_conv_ref(x_nchw, params):
    x = jnp.transpose(x_nchw, (0, 2, 3, 1))
    x = _ref_stage(x, params["w1"], params["b1"], params["g1"], params["be1"])
    x = _ref_stage(x, params["w2"], params["b2"], params["g2"], params["be2"])
    return jnp.transpose(x, (0, 3, 1, 2))


def init_params(key, in_c, out_c):
    """Deterministic synthetic params. Conv weights stored HWIO.

    BN gamma/beta follow PyTorch BatchNorm2d default init (ones/zeros).
    Conv biases b1/b2 are kept for module parity; they cancel under
    train-mode BN and are not used by the Pallas path.
    """
    k1, k2, k3, k4 = jax.random.split(key, 4)
    return {
        "w1": 0.1 * jax.random.normal(k1, (3, 3, in_c, out_c), jnp.float32),
        "b1": 0.1 * jax.random.normal(k2, (out_c,), jnp.float32),
        "g1": jnp.ones((out_c,), jnp.float32),
        "be1": jnp.zeros((out_c,), jnp.float32),
        "w2": 0.1 * jax.random.normal(k3, (3, 3, out_c, out_c), jnp.float32),
        "b2": 0.1 * jax.random.normal(k4, (out_c,), jnp.float32),
        "g2": jnp.ones((out_c,), jnp.float32),
        "be2": jnp.zeros((out_c,), jnp.float32),
    }
    # TODO(synk): BatchNorm running_mean/running_var buffer updates (a training
    # side effect) are not modeled; they do not affect the forward output.


if __name__ == "__main__":
    key = jax.random.PRNGKey(0)
    kx, kp = jax.random.split(key)

    N, in_c, out_c, H, W = 2, 4, 8, 16, 16
    x = jax.random.normal(kx, (N, in_c, H, W), jnp.float32)   # NCHW like PyTorch
    params = init_params(kp, in_c, out_c)

    out = jax.block_until_ready(jax.jit(double_conv)(x, params))
    ref = jax.block_until_ready(double_conv_ref(x, params))

    assert out.shape == (N, out_c, H, W), out.shape
    # bf16 matmul operands + bf16 conv/intermediate storage -> loosened tol.
    assert jnp.allclose(out, ref, atol=7e-2, rtol=5e-2), \
        float(jnp.max(jnp.abs(out - ref)))

    print("KERNEL_OK")
</pallas_src>

<mosaic_0001>
module attributes {stable_mosaic.version = 11 : i64} {
  func.func @_conv_stats_kernel_k1(%arg0: i32, %arg1: memref<256x128xbf16, #tpu.memory_space<vmem>>, %arg2: memref<128x128xbf16, #tpu.memory_space<vmem>>, %arg3: memref<256x128xbf16, #tpu.memory_space<vmem>>, %arg4: memref<1x8x128xf32, #tpu.memory_space<vmem>>) attributes {dimension_semantics = [#tpu.dimension_semantics<parallel>], iteration_bounds = array<i64: 2>, scalar_prefetch = 0 : i64, scratch_operands = 0 : i64, tpu.core_type = #tpu.core_type<tc>, window_params = [{transform_indices = @transform_0, window_bounds = array<i64: 256, 128>}, {pipeline_mode = #tpu.pipeline_mode<synchronous>, transform_indices = @transform_1, window_bounds = array<i64: 128, 128>}, {transform_indices = @transform_2, window_bounds = array<i64: 256, 128>}, {transform_indices = @transform_3, window_bounds = array<i64: 1, 8, 128>}]} {
    %c0 = arith.constant 0 : index
    %c0_0 = arith.constant 0 : index
    %0 = vector.load %arg1[%c0, %c0_0] : memref<256x128xbf16, #tpu.memory_space<vmem>>, vector<256x128xbf16>
    %c0_1 = arith.constant 0 : index
    %c0_2 = arith.constant 0 : index
    %1 = vector.load %arg2[%c0_1, %c0_2] : memref<128x128xbf16, #tpu.memory_space<vmem>>, vector<128x128xbf16>
    %cst = arith.constant dense<0.000000e+00> : vector<256x128xf32>
    %2 = tpu.matmul %0, %1, %cst {dimension_numbers = #tpu.dot_dimension_numbers<[1], [0], [0], [1], [0, 0, 1, 1], [], []>} : vector<256x128xbf16>, vector<128x128xbf16>, vector<256x128xf32> -> vector<256x128xf32>
    %3 = arith.truncf %2 : vector<256x128xf32> to vector<256x128xbf16>
    %c0_3 = arith.constant 0 : index
    %c0_4 = arith.constant 0 : index
    %4 = vector.load %arg3[%c0_3, %c0_4] : memref<256x128xbf16, #tpu.memory_space<vmem>>, vector<256x128xbf16>
    tpu.vector_store %arg3[%c0_3, %c0_4], %3 {strides = array<i32>} : memref<256x128xbf16, #tpu.memory_space<vmem>>, vector<256x128xbf16>,
    %cst_5 = arith.constant dense<0.000000e+00> : vector<128xf32>
    %5 = vector.multi_reduction <add>, %2, %cst_5 [0] : vector<256x128xf32> to vector<128xf32>
    %6 = vector.shape_cast %5 : vector<128xf32> to vector<1x128xf32>
    %7 = arith.mulf %2, %2 : vector<256x128xf32>
    %cst_6 = arith.constant dense<0.000000e+00> : vector<128xf32>
    %8 = vector.multi_reduction <add>, %7, %cst_6 [0] : vector<256x128xf32> to vector<128xf32>
    %9 = vector.shape_cast %8 : vector<128xf32> to vector<1x128xf32>
    %cst_7 = arith.constant 0.000000e+00 : f32
    %10 = vector.broadcast %cst_7 : f32 to vector<6x128xf32>
    %11 = tpu.concatenate %6, %9, %10 in 0 : vector<1x128xf32>, vector<1x128xf32>, vector<6x128xf32> -> vector<8x128xf32>
    %12 = vector.shape_cast %11 : vector<8x128xf32> to vector<1x8x128xf32>
    %c0_8 = arith.constant 0 : index
    %c0_9 = arith.constant 0 : index
    %c0_10 = arith.constant 0 : index
    %13 = vector.load %arg4[%c0_8, %c0_9, %c0_10] : memref<1x8x128xf32, #tpu.memory_space<vmem>>, vector<1x8x128xf32>
    tpu.vector_store %arg4[%c0_8, %c0_9, %c0_10], %12 {strides = array<i32>} : memref<1x8x128xf32, #tpu.memory_space<vmem>>, vector<1x8x128xf32>,
    return
  }
  func.func @transform_0(%arg0: i32) -> (i32, i32) {
    %c0_i32 = arith.constant 0 : i32
    %c0_i32_0 = arith.constant 0 : i32
    return %arg0, %c0_i32 : i32, i32
  }
  func.func @transform_1(%arg0: i32) -> (i32, i32) {
    %c0_i32 = arith.constant 0 : i32
    %c0_i32_0 = arith.constant 0 : i32
    %c0_i32_1 = arith.constant 0 : i32
    return %c0_i32, %c0_i32_0 : i32, i32
  }
  func.func @transform_2(%arg0: i32) -> (i32, i32) {
    %c0_i32 = arith.constant 0 : i32
    %c0_i32_0 = arith.constant 0 : i32
    return %arg0, %c0_i32 : i32, i32
  }
  func.func @transform_3(%arg0: i32) -> (i32, i32, i32) {
    %c0_i32 = arith.constant 0 : i32
    %c0_i32_0 = arith.constant 0 : i32
    %c0_i32_1 = arith.constant 0 : i32
    return %arg0, %c0_i32, %c0_i32_0 : i32, i32, i32
  }
}

</mosaic_0001>

<llo_original>
// kernel: double_conv.2
$region0: #{double_conv.2}
  #allocation0 [shape = 'u32[]', space=smem, size = 0x4, offset = 0x4, fixed_abs, tag = 'smem constant byte address 0x4 - core index']
  #allocation1 [shape = 'u32[144,128]{1,0:T(1,128)}', space=vmem, size = 0x12000, scoped, tag = 'internal scratch']
  %s0 = inlined_call_operand.vmem [shape: bf16[512,128], index: 0, kind: input, shape index: {}]
  %s1 = inlined_call_operand.vmem [shape: bf16[128,128], index: 1, kind: input, shape index: {}]
  %s2 = inlined_call_operand.vmem [shape: bf16[512,128], index: 2, kind: output, shape index: {0}]
  %s3 = inlined_call_operand.vmem [shape: f32[2,8,128], index: 3, kind: output, shape index: {1}]
  %4 = xla_tuple %s2, %s3
  %s5 = sld [smem:[#allocation0]]
  $region49: #{double_conv.2} parent=0
    _
  %s7 = ssub.s32 1, %s5
  %s8 = scalar_select 0, %s7, %s5
  loop: start=0, step=1, limit=4
  $region2: #{double_conv.2} parent=0 // loop_pre_header
    _
  $region3: #{double_conv.2} parent=0 // loop_header
    %s10 = sphi 0, %s14
    %p11 = scmp.ge.s32.totalorder %s10, 4
    %s20 = sphi 0, %s22
    %s23 = sphi 0, %s20
    %s24 = sphi 0, %s23
    %s40 = sphi 0, %s24
    %s44 = sphi 0, %s44
    %s46 = sphi 0, %s44
    %s47 = sphi 0, %s46
    %s61 = sphi 0, %s47
    %s67 = sphi 0, %s69
    %s70 = sphi 0, %s67
    %s71 = sphi 0, %s70
    %s87 = sphi 0, %s71
    %s93 = sphi 0, %s95
    %s96 = sphi 0, %s93
    %s97 = sphi 0, %s96
    %s113 = sphi 0, %s97
  $region4: #{double_conv.2} parent=0 // loop_header_branch
    %13 = sbr.rel (%p11) target = $region8
  $region5: #{double_conv.2} parent=0 // loop_body
    %s15 = ssub.s32 %s10, 1
    %s16 = ssub.s32 %s10, 2
    %s17 = sadd.s32 %s10, 1
    %s18 = ssub.s32 %s10, %s17
    %p19 = scmp.eq.s32.totalorder %s18, 0
    %s21 = sadd.s32 %s20, 1
    %s22 = scalar_select %p19, %s20, %s21
    %p25 = pneg %p19
    %p26 = scmp.eq.s32.totalorder %s10, 1
    %p27 = por %p25, %p26
    %p28 = scmp.ne.s32.totalorder %s20, %s23
    %p29 = scmp.eq.s32.totalorder %s10, 0
    %p30 = por %p28, %p29
    %p31 = scmp.ne.s32.totalorder %s20, %s23
    %p32 = scmp.eq.s32.totalorder %s15, 1
    %p33 = por %p31, %p32
    %p34 = scmp.ne.s32.totalorder %s23, %s24
    %p35 = scmp.eq.s32.totalorder %s15, 0
    %p36 = por %p34, %p35
    %p37 = scmp.ne.s32.totalorder %s23, %s24
    %p38 = scmp.eq.s32.totalorder %s16, 1
    %p39 = por %p37, %p38
    %p41 = scmp.ne.s32.totalorder %s24, %s40
    %p42 = scmp.eq.s32.totalorder %s16, 0
    %p43 = por %p41, %p42
    %s45 = sadd.s32 %s44, 1
    %p48 = scmp.eq.s32.totalorder %s10, 1
    %p49 = scmp.ne.s32.totalorder %s44, %s46
    %p50 = scmp.eq.s32.totalorder %s10, 0
    %p51 = por %p49, %p50
    %p52 = scmp.ne.s32.totalorder %s44, %s46
    %p53 = scmp.eq.s32.totalorder %s15, 1
    %p54 = por %p52, %p53
    %p55 = scmp.ne.s32.totalorder %s46, %s47
    %p56 = scmp.eq.s32.totalorder %s15, 0
    %p57 = por %p55, %p56
    %p58 = scmp.ne.s32.totalorder %s46, %s47
    %p59 = scmp.eq.s32.totalorder %s16, 1
    %p60 = por %p58, %p59
    %p62 = scmp.ne.s32.totalorder %s47, %s61
    %p63 = scmp.eq.s32.totalorder %s16, 0
    %p64 = por %p62, %p63
    %s65 = ssub.s32 %s10, %s17
    %p66 = scmp.eq.s32.totalorder %s65, 0
    %s68 = sadd.s32 %s67, 1
    %s69 = scalar_select %p66, %s67, %s68
    %p72 = pneg %p66
    %p73 = scmp.eq.s32.totalorder %s10, 1
    %p74 = por %p72, %p73
    %p75 = scmp.ne.s32.totalorder %s67, %s70
    %p76 = scmp.eq.s32.totalorder %s10, 0
    %p77 = por %p75, %p76
    %p78 = scmp.ne.s32.totalorder %s67, %s70
    %p79 = scmp.eq.s32.totalorder %s15, 1
    %p80 = por %p78, %p79
    %p81 = scmp.ne.s32.totalorder %s70, %s71
    %p82 = scmp.eq.s32.totalorder %s15, 0
    %p83 = por %p81, %p82
    %p84 = scmp.ne.s32.totalorder %s70, %s71
    %p85 = scmp.eq.s32.totalorder %s16, 1
    %p86 = por %p84, %p85
    %p88 = scmp.ne.s32.totalorder %s71, %s87
    %p89 = scmp.eq.s32.totalorder %s16, 0
    %p90 = por %p88, %p89
    %s91 = ssub.s32 %s10, %s17
    %p92 = scmp.eq.s32.totalorder %s91, 0
    %s94 = sadd.s32 %s93, 1
    %s95 = scalar_select %p92, %s93, %s94
    %p98 = pneg %p92
    %p99 = scmp.eq.s32.totalorder %s10, 1
    %p100 = por %p98, %p99
    %p101 = scmp.ne.s32.totalorder %s93, %s96
    %p102 = scmp.eq.s32.totalorder %s10, 0
    %p103 = por %p101, %p102
    %p104 = scmp.ne.s32.totalorder %s93, %s96
    %p105 = scmp.eq.s32.totalorder %s15, 1
    %p106 = por %p104, %p105
    %p107 = scmp.ne.s32.totalorder %s96, %s97
    %p108 = scmp.eq.s32.totalorder %s15, 0
    %p109 = por %p107, %p108
    %p110 = scmp.ne.s32.totalorder %s96, %s97
    %p111 = scmp.eq.s32.totalorder %s16, 1
    %p112 = por %p110, %p111
    %p114 = scmp.ne.s32.totalorder %s97, %s113
    %p115 = scmp.eq.s32.totalorder %s16, 0
    %p116 = por %p114, %p115
    %p117 = scmp.le.s32.totalorder 1, %s10
    %p118 = scmp.lt.s32.totalorder %s10, 3
    %p119 = pnand %p117, %p118
    %p120 = pneg %p119
    // Predicated region
    $region9: #{double_conv.2} parent=5 // pred_check
      _
    $region10: #{double_conv.2} parent=5 // pred_check_branch
      %122 = sbr.rel (%p119) target = $region12
    $region11: #{double_conv.2} parent=5 // pred_region
      %s123 = ssub.s32 %s10, 1
      // Predicated region
      $region13: #{double_conv.2} parent=11 // pred_check
        %p124 = pneg %p57
      $region14: #{double_conv.2} parent=11 // pred_check_branch
        %126 = sbr.rel (%p124) target = $region16
      $region15: #{double_conv.2} parent=11 // pred_region
        _
      $region16: #{double_conv.2} parent=11 // pred_fallthru
        _
    $region12: #{double_conv.2} parent=5 // pred_fallthru
      _
    %p127 = scmp.lt.s32.totalorder %s10, 2
    // Predicated region
    $region17: #{double_conv.2} parent=5 // pred_check
      %p128 = pneg %p127
    $region18: #{double_conv.2} parent=5 // pred_check_branch
      %130 = sbr.rel (%p128) target = $region20
    $region19: #{double_conv.2} parent=5 // pred_region
      // Predicated region
      $region21: #{double_conv.2} parent=19 // pred_check
        %p131 = pneg %p30
      $region22: #{double_conv.2} parent=19 // pred_check_branch
        %133 = sbr.rel (%p131) target = $region24
      $region23: #{double_conv.2} parent=19 // pred_region
        %s134 = smul.u32 32, %s10
        %p135 = scmp.lt.s32.totalorder %s134, 63
        %s136 = scalar_select %p135, %s134, 63
        %s137 = smul.addr %s136, 4
        %s138 = scalar_lea.vmem %s0, %s137
        %s139 = smul.u32 32, %s10
      $region24: #{double_conv.2} parent=19 // pred_fallthru
        _
    $region20: #{double_conv.2} parent=5 // pred_fallthru
      _
    %p140 = scmp.le.s32.totalorder 1, %s10
    %p141 = scmp.lt.s32.totalorder %s10, 3
    %p142 = pnand %p140, %p141
    %p143 = pneg %p142
    // Predicated region
    $region25: #{double_conv.2} parent=5 // pred_check
      _
    $region26: #{double_conv.2} parent=5 // pred_check_branch
      %145 = sbr.rel (%p142) target = $region28
    $region27: #{double_conv.2} parent=5 // pred_region
      %s146 = ssub.s32 %s10, 1
      %s147 = smul.u32 32, %s15
      %p148 = scmp.lt.s32.totalorder %s147, 63
      %s149 = scalar_select %p148, %s147, 63
      %s150 = smul.addr %s149, 4
      %s151 = scalar_lea.vmem %s0, %s150
      %p152 = pneg %p36
      %p153 = pneg %p33
      %p154 = pneg %p57
      %p155 = pneg %p54
      %p156 = pneg %p83
      %p157 = pneg %p80
      %s158 = smul.u32 32, %s15
      %p159 = scmp.lt.s32.totalorder %s158, 63
      %s160 = scalar_select %p159, %s158, 63
      %s161 = smul.addr %s160, 4
      %s162 = scalar_lea.vmem %s2, %s161
      %p163 = pneg %p109
      %p164 = pneg %p106
      %p165 = scmp.lt.s32.totalorder %s15, 1
      %s166 = scalar_select %p165, %s15, 1
      %s167 = smul.addr %s166, 8
      %s168 = scalar_lea.vmem %s3, %s167
      %s169 = smul.u32 32, %s15
      %p170 = scmp.lt.s32.totalorder %s169, 63
      %s171 = scalar_select %p170, %s169, 63
      %s172 = smul.addr %s171, 4
      %s173 = scalar_lea.vmem %s0, %s172
      %s174 = smul.u32 32, %s15
      %s175 = smul.u32 32, %s15
      %p176 = scmp.lt.s32.totalorder %s175, 63
      %s177 = scalar_select %p176, %s175, 63
      %s178 = smul.addr %s177, 4
      %s179 = scalar_lea.vmem %s2, %s178
      %s180 = smul.u32 32, %s15
      %p181 = scmp.lt.s32.totalorder %s15, 1
      %s182 = scalar_select %p181, %s15, 1
      %s183 = smul.addr %s182, 8
      %s184 = scalar_lea.vmem %s3, %s183
      %v186 = vld [vmem:[%s173] sm:$0xf]
      %v187 = vld [vmem:[%s173 + $0x4] sm:$0xf]
      %v188 = vld [vmem:[%s173 + $0x8] sm:$0xf]
      %v189 = vld [vmem:[%s173 + $0xc] sm:$0xf]
      %v190 = vld [vmem:[%s173 + $0x10] sm:$0xf]
      %v191 = vld [vmem:[%s173 + $0x14] sm:$0xf]
      %v192 = vld [vmem:[%s173 + $0x18] sm:$0xf]
      %v193 = vld [vmem:[%s173 + $0x1c] sm:$0xf]
      %v194 = vld [vmem:[%s173 + $0x20] sm:$0xf]
      %v195 = vld [vmem:[%s173 + $0x24] sm:$0xf]
      %v196 = vld [vmem:[%s173 + $0x28] sm:$0xf]
      %v197 = vld [vmem:[%s173 + $0x2c] sm:$0xf]
      %v198 = vld [vmem:[%s173 + $0x30] sm:$0xf]
      %v199 = vld [vmem:[%s173 + $0x34] sm:$0xf]
      %v200 = vld [vmem:[%s173 + $0x38] sm:$0xf]
      %v201 = vld [vmem:[%s173 + $0x3c] sm:$0xf]
      %v202 = vld [vmem:[%s173 + $0x40] sm:$0xf]
      %v203 = vld [vmem:[%s173 + $0x44] sm:$0xf]
      %v204 = vld [vmem:[%s173 + $0x48] sm:$0xf]
      %v205 = vld [vmem:[%s173 + $0x4c] sm:$0xf]
      %v206 = vld [vmem:[%s173 + $0x50] sm:$0xf]
      %v207 = vld [vmem:[%s173 + $0x54] sm:$0xf]
      %v208 = vld [vmem:[%s173 + $0x58] sm:$0xf]
      %v209 = vld [vmem:[%s173 + $0x5c] sm:$0xf]
      %v210 = vld [vmem:[%s173 + $0x60] sm:$0xf]
      %v211 = vld [vmem:[%s173 + $0x64] sm:$0xf]
      %v212 = vld [vmem:[%s173 + $0x68] sm:$0xf]
      %v213 = vld [vmem:[%s173 + $0x6c] sm:$0xf]
      %v214 = vld [vmem:[%s173 + $0x70] sm:$0xf]
      %v215 = vld [vmem:[%s173 + $0x74] sm:$0xf]
      %v216 = vld [vmem:[%s173 + $0x78] sm:$0xf]
      %v217 = vld [vmem:[%s173 + $0x7c] sm:$0xf]
      %v218 = vld [vmem:[%s1] sm:$0xf]
      %v219 = vld [vmem:[%s1 + $0x4] sm:$0xf]
      %v220 = vld [vmem:[%s1 + $0x8] sm:$0xf]
      %v221 = vld [vmem:[%s1 + $0xc] sm:$0xf]
      %v222 = vld [vmem:[%s1 + $0x10] sm:$0xf]
      %v223 = vld [vmem:[%s1 + $0x14] sm:$0xf]
      %v224 = vld [vmem:[%s1 + $0x18] sm:$0xf]
      %v225 = vld [vmem:[%s1 + $0x1c] sm:$0xf]
      %v226 = vld [vmem:[%s1 + $0x20] sm:$0xf]
      %v227 = vld [vmem:[%s1 + $0x24] sm:$0xf]
      %v228 = vld [vmem:[%s1 + $0x28] sm:$0xf]
      %v229 = vld [vmem:[%s1 + $0x2c] sm:$0xf]
      %v230 = vld [vmem:[%s1 + $0x30] sm:$0xf]
      %v231 = vld [vmem:[%s1 + $0x34] sm:$0xf]
      %v232 = vld [vmem:[%s1 + $0x38] sm:$0xf]
      %v233 = vld [vmem:[%s1 + $0x3c] sm:$0xf]
      %v266 = vunpack.c.l.b16 %v186
      %v267 = vunpack.c.l.b16 %v187
      %v268 = vunpack.c.l.b16 %v188
      %v269 = vunpack.c.l.b16 %v189
      %v270 = vunpack.c.l.b16 %v190
      %v271 = vunpack.c.l.b16 %v191
      %v272 = vunpack.c.l.b16 %v192
      %v273 = vunpack.c.l.b16 %v193
      %v274 = vunpack.c.l.b16 %v194
      %v275 = vunpack.c.l.b16 %v195
      %v276 = vunpack.c.l.b16 %v196
      %v277 = vunpack.c.l.b16 %v197
      %v278 = vunpack.c.l.b16 %v198
      %v279 = vunpack.c.l.b16 %v199
      %v280 = vunpack.c.l.b16 %v200
      %v281 = vunpack.c.l.b16 %v201
      %v282 = vunpack.c.l.b16 %v202
      %v283 = vunpack.c.l.b16 %v203
      %v284 = vunpack.c.l.b16 %v204
      %v285 = vunpack.c.l.b16 %v205
      %v286 = vunpack.c.l.b16 %v206
      %v287 = vunpack.c.l.b16 %v207
      %v288 = vunpack.c.l.b16 %v208
      %v289 = vunpack.c.l.b16 %v209
      %v290 = vunpack.c.l.b16 %v210
      %v291 = vunpack.c.l.b16 %v211
      %v292 = vunpack.c.l.b16 %v212
      %v293 = vunpack.c.l.b16 %v213
      %v294 = vunpack.c.l.b16 %v214
      %v295 = vunpack.c.l.b16 %v215
      %v296 = vunpack.c.l.b16 %v216
      %v297 = vunpack.c.l.b16 %v217
      %v298 = vpack.c.b16 %v267, %v266
      %v299 = vpack.c.b16 %v269, %v268
      %v300 = vpack.c.b16 %v271, %v270
      %v301 = vpack.c.b16 %v273, %v272
      %v302 = vpack.c.b16 %v275, %v274
      %v303 = vpack.c.b16 %v277, %v276
      %v304 = vpack.c.b16 %v279, %v278
      %v305 = vpack.c.b16 %v281, %v280
      %v306 = vpack.c.b16 %v283, %v282
      %v307 = vpack.c.b16 %v285, %v284
      %v308 = vpack.c.b16 %v287, %v286
      %v309 = vpack.c.b16 %v289, %v288
      %v310 = vpack.c.b16 %v291, %v290
      %v311 = vpack.c.b16 %v293, %v292
      %v312 = vpack.c.b16 %v295, %v294
      %v313 = vpack.c.b16 %v297, %v296
      %v346 = vunpack.c.l.b16 %v218
      %v347 = vunpack.c.l.b16 %v219
      %v348 = vunpack.c.l.b16 %v220
      %v349 = vunpack.c.l.b16 %v221
      %v350 = vunpack.c.l.b16 %v222
      %v351 = vunpack.c.l.b16 %v223
      %v352 = vunpack.c.l.b16 %v224
      %v353 = vunpack.c.l.b16 %v225
      %v354 = vunpack.c.l.b16 %v226
      %v355 = vunpack.c.l.b16 %v227
      %v356 = vunpack.c.l.b16 %v228
      %v357 = vunpack.c.l.b16 %v229
      %v358 = vunpack.c.l.b16 %v230
      %v359 = vunpack.c.l.b16 %v231
      %v360 = vunpack.c.l.b16 %v232
      %v361 = vunpack.c.l.b16 %v233
      %v362 = vpack.c.b16 %v347, %v346
      %v363 = vpack.c.b16 %v349, %v348
      %v364 = vpack.c.b16 %v351, %v350
      %v365 = vpack.c.b16 %v353, %v352
      %v366 = vpack.c.b16 %v355, %v354
      %v367 = vpack.c.b16 %v357, %v356
      %v368 = vpack.c.b16 %v359, %v358
      %v369 = vpack.c.b16 %v361, %v360
      %378 = vmatprep.subr.bf16.mxu0 0
      %379 = vmatpush1.bf16.msra.mxu0 %v369
      %380 = vmatprep.subr.bf16.mxu0 0
      %381 = vmatpush1.bf16.msra.mxu0 %v368
      %382 = vmatprep.subr.bf16.mxu0 0
      %383 = vmatpush1.bf16.msra.mxu0 %v367
      %384 = vmatprep.subr.bf16.mxu0 0
      %385 = vmatpush1.bf16.msra.mxu0 %v366
      %386 = vmatprep.subr.bf16.mxu0 0
      %387 = vmatpush1.bf16.msra.mxu0 %v365
      %388 = vmatprep.subr.bf16.mxu0 0
      %389 = vmatpush1.bf16.msra.mxu0 %v364
      %390 = vmatprep.subr.bf16.mxu0 0
      %391 = vmatpush1.bf16.msra.mxu0 %v363
      %392 = vmatprep.subr.bf16.mxu0 0
      %393 = vmatpush1.bf16.msra.mxu0 %v362
      %394 = vmatprep.subr.bf16.mxu0 0
      %395 = vmatpush2.bf16.msra.mxu0 0
      %396 = vmatprep.subr.bf16.mxu0 0
      %397 = vmatpush2.bf16.msra.mxu0 0
      %398 = vmatprep.subr.bf16.mxu0 0
      %399 = vmatpush2.bf16.msra.mxu0 0
      %400 = vmatprep.subr.bf16.mxu0 0
      %401 = vmatpush2.bf16.msra.mxu0 0
      %402 = vmatprep.subr.bf16.mxu0 0
      %403 = vmatpush2.bf16.msra.mxu0 0
      %404 = vmatprep.subr.bf16.mxu0 0
      %405 = vmatpush2.bf16.msra.mxu0 0
      %406 = vmatprep.subr.bf16.mxu0 0
      %407 = vmatpush2.bf16.msra.mxu0 0
      %408 = vmatprep.subr.bf16.mxu0 0
      %409 = vmatpush2.bf16.msra.mxu0 0
      %410 = vmatprep.mubr.bf16.mxu0 0
      %411 = vmatmul.mubr.bf16.gmra.mxu0 %v298
      %v412 = vpop.f32.mrf.mxu0
      %v413 = vadd.f32 0.0, %v412
      %v414 = vpop.f32.mrf.mxu0
      %v415 = vpop.f32.mrf.mxu0
      %v416 = vadd.f32 0.0, %v415
      %v417 = vpop.f32.mrf.mxu0
      %418 = vmatprep.mubr.bf16.mxu0 0
      %419 = vmatmul.mubr.bf16.gmra.mxu0 %v299
      %v420 = vpop.f32.mrf.mxu0
      %v421 = vadd.f32 0.0, %v420
      %v422 = vpop.f32.mrf.mxu0
      %v423 = vpop.f32.mrf.mxu0
      %v424 = vadd.f32 0.0, %v423
      %v425 = vpop.f32.mrf.mxu0
      %426 = vmatprep.mubr.bf16.mxu0 0
      %427 = vmatmul.mubr.bf16.gmra.mxu0 %v300
      %v428 = vpop.f32.mrf.mxu0
      %v429 = vadd.f32 0.0, %v428
      %v430 = vpop.f32.mrf.mxu0
      %v431 = vpop.f32.mrf.mxu0
      %v432 = vadd.f32 0.0, %v431
      %v433 = vpop.f32.mrf.mxu0
      %434 = vmatprep.mubr.bf16.mxu0 0
      %435 = vmatmul.mubr.bf16.gmra.mxu0 %v301
      %v436 = vpop.f32.mrf.mxu0
      %v437 = vadd.f32 0.0, %v436
      %v438 = vpop.f32.mrf.mxu0
      %v439 = vpop.f32.mrf.mxu0
      %v440 = vadd.f32 0.0, %v439
      %v441 = vpop.f32.mrf.mxu0
      %442 = vmatprep.mubr.bf16.mxu0 0
      %443 = vmatmul.mubr.bf16.gmra.mxu0 %v302
      %v444 = vpop.f32.mrf.mxu0
      %v445 = vadd.f32 0.0, %v444
      %v446 = vpop.f32.mrf.mxu0
      %v447 = vpop.f32.mrf.mxu0
      %v448 = vadd.f32 0.0, %v447
      %v449 = vpop.f32.mrf.mxu0
      %450 = vmatprep.mubr.bf16.mxu0 0
      %451 = vmatmul.mubr.bf16.gmra.mxu0 %v303
      %v452 = vpop.f32.mrf.mxu0
      %v453 = vadd.f32 0.0, %v452
      %v454 = vpop.f32.mrf.mxu0
      %v455 = vpop.f32.mrf.mxu0
      %v456 = vadd.f32 0.0, %v455
      %v457 = vpop.f32.mrf.mxu0
      %458 = vmatprep.mubr.bf16.mxu0 0
      %459 = vmatmul.mubr.bf16.gmra.mxu0 %v304
      %v460 = vpop.f32.mrf.mxu0
      %v461 = vadd.f32 0.0, %v460
      %v462 = vpop.f32.mrf.mxu0
      %v463 = vpop.f32.mrf.mxu0
      %v464 = vadd.f32 0.0, %v463
      %v465 = vpop.f32.mrf.mxu0
      %466 = vmatprep.mubr.bf16.mxu0 0
      %467 = vmatmul.mubr.bf16.gmra.mxu0 %v305
      %v468 = vpop.f32.mrf.mxu0
      %v469 = vadd.f32 0.0, %v468
      %v470 = vpop.f32.mrf.mxu0
      %v471 = vpop.f32.mrf.mxu0
      %v472 = vadd.f32 0.0, %v471
      %v473 = vpop.f32.mrf.mxu0
      %474 = vmatprep.mubr.bf16.mxu0 0
      %475 = vmatmul.mubr.bf16.gmra.mxu0 %v306
      %v476 = vpop.f32.mrf.mxu0
      %v477 = vadd.f32 0.0, %v476
      %v478 = vpop.f32.mrf.mxu0
      %v479 = vpop.f32.mrf.mxu0
      %v480 = vadd.f32 0.0, %v479
      %v481 = vpop.f32.mrf.mxu0
      %482 = vmatprep.mubr.bf16.mxu0 0
      %483 = vmatmul.mubr.bf16.gmra.mxu0 %v307
      %v484 = vpop.f32.mrf.mxu0
      %v485 = vadd.f32 0.0, %v484
      %v486 = vpop.f32.mrf.mxu0
      %v487 = vpop.f32.mrf.mxu0
      %v488 = vadd.f32 0.0, %v487
      %v489 = vpop.f32.mrf.mxu0
      %490 = vmatprep.mubr.bf16.mxu0 0
      %491 = vmatmul.mubr.bf16.gmra.mxu0 %v308
      %v492 = vpop.f32.mrf.mxu0
      %v493 = vadd.f32 0.0, %v492
      %v494 = vpop.f32.mrf.mxu0
      %v495 = vpop.f32.mrf.mxu0
      %v496 = vadd.f32 0.0, %v495
      %v497 = vpop.f32.mrf.mxu0
      %498 = vmatprep.mubr.bf16.mxu0 0
      %499 = vmatmul.mubr.bf16.gmra.mxu0 %v309
      %v500 = vpop.f32.mrf.mxu0
      %v501 = vadd.f32 0.0, %v500
      %v502 = vpop.f32.mrf.mxu0
      %v503 = vpop.f32.mrf.mxu0
      %v504 = vadd.f32 0.0, %v503
      %v505 = vpop.f32.mrf.mxu0
      %506 = vmatprep.mubr.bf16.mxu0 0
      %507 = vmatmul.mubr.bf16.gmra.mxu0 %v310
      %v508 = vpop.f32.mrf.mxu0
      %v509 = vadd.f32 0.0, %v508
      %v510 = vpop.f32.mrf.mxu0
      %v511 = vpop.f32.mrf.mxu0
      %v512 = vadd.f32 0.0, %v511
      %v513 = vpop.f32.mrf.mxu0
      %514 = vmatprep.mubr.bf16.mxu0 0
      %515 = vmatmul.mubr.bf16.gmra.mxu0 %v311
      %v516 = vpop.f32.mrf.mxu0
      %v517 = vadd.f32 0.0, %v516
      %v518 = vpop.f32.mrf.mxu0
      %v519 = vpop.f32.mrf.mxu0
      %v520 = vadd.f32 0.0, %v519
      %v521 = vpop.f32.mrf.mxu0
      %522 = vmatprep.mubr.bf16.mxu0 0
      %523 = vmatmul.mubr.bf16.gmra.mxu0 %v312
      %v524 = vpop.f32.mrf.mxu0
      %v525 = vadd.f32 0.0, %v524
      %v526 = vpop.f32.mrf.mxu0
      %v527 = vpop.f32.mrf.mxu0
      %v528 = vadd.f32 0.0, %v527
      %v529 = vpop.f32.mrf.mxu0
      %530 = vmatprep.mubr.bf16.mxu0 0
      %531 = vmatmul.mubr.bf16.gmra.mxu0 %v313
      %v532 = vpop.f32.mrf.mxu0
      %v533 = vadd.f32 0.0, %v532
      %v534 = vpop.f32.mrf.mxu0
      %v535 = vpop.f32.mrf.mxu0
      %v536 = vadd.f32 0.0, %v535
      %v537 = vpop.f32.mrf.mxu0
      %538 = vdwg.mxu0
      %v539 = vpack.c.bf16 %v416, %v413
      %v540 = vpack.c.bf16 %v424, %v421
      %v541 = vpack.c.bf16 %v432, %v429
      %v542 = vpack.c.bf16 %v440, %v437
      %v543 = vpack.c.bf16 %v448, %v445
      %v544 = vpack.c.bf16 %v456, %v453
      %v545 = vpack.c.bf16 %v464, %v461
      %v546 = vpack.c.bf16 %v472, %v469
      %v547 = vpack.c.bf16 %v480, %v477
      %v548 = vpack.c.bf16 %v488, %v485
      %v549 = vpack.c.bf16 %v496, %v493
      %v550 = vpack.c.bf16 %v504, %v501
      %v551 = vpack.c.bf16 %v512, %v509
      %v552 = vpack.c.bf16 %v520, %v517
      %v553 = vpack.c.bf16 %v528, %v525
      %v554 = vpack.c.bf16 %v536, %v533
      %v571 = vunpack.c.l.b16 %v539
      %v572 = vunpack.c.h.b16 %v539
      %v573 = vunpack.c.l.b16 %v540
      %v574 = vunpack.c.h.b16 %v540
      %v575 = vunpack.c.l.b16 %v541
      %v576 = vunpack.c.h.b16 %v541
      %v577 = vunpack.c.l.b16 %v542
      %v578 = vunpack.c.h.b16 %v542
      %v579 = vunpack.c.l.b16 %v543
      %v580 = vunpack.c.h.b16 %v543
      %v581 = vunpack.c.l.b16 %v544
      %v582 = vunpack.c.h.b16 %v544
      %v583 = vunpack.c.l.b16 %v545
      %v584 = vunpack.c.h.b16 %v545
      %v585 = vunpack.c.l.b16 %v546
      %v586 = vunpack.c.h.b16 %v546
      %v587 = vunpack.c.l.b16 %v547
      %v588 = vunpack.c.h.b16 %v547
      %v589 = vunpack.c.l.b16 %v548
      %v590 = vunpack.c.h.b16 %v548
      %v591 = vunpack.c.l.b16 %v549
      %v592 = vunpack.c.h.b16 %v549
      %v593 = vunpack.c.l.b16 %v550
      %v594 = vunpack.c.h.b16 %v550
      %v595 = vunpack.c.l.b16 %v551
      %v596 = vunpack.c.h.b16 %v551
      %v597 = vunpack.c.l.b16 %v552
      %v598 = vunpack.c.h.b16 %v552
      %v599 = vunpack.c.l.b16 %v553
      %v600 = vunpack.c.h.b16 %v553
      %v601 = vunpack.c.l.b16 %v554
      %v602 = vunpack.c.h.b16 %v554
      %v603 = vpack.c.b16 %v571, %v571
      %v604 = vpack.c.b16 %v572, %v572
      %v605 = vpack.c.b16 %v573, %v573
      %v606 = vpack.c.b16 %v574, %v574
      %v607 = vpack.c.b16 %v575, %v575
      %v608 = vpack.c.b16 %v576, %v576
      %v609 = vpack.c.b16 %v577, %v577
      %v610 = vpack.c.b16 %v578, %v578
      %v611 = vpack.c.b16 %v579, %v579
      %v612 = vpack.c.b16 %v580, %v580
      %v613 = vpack.c.b16 %v581, %v581
      %v614 = vpack.c.b16 %v582, %v582
      %v615 = vpack.c.b16 %v583, %v583
      %v616 = vpack.c.b16 %v584, %v584
      %v617 = vpack.c.b16 %v585, %v585
      %v618 = vpack.c.b16 %v586, %v586
      %v619 = vpack.c.b16 %v587, %v587
      %v620 = vpack.c.b16 %v588, %v588
      %v621 = vpack.c.b16 %v589, %v589
      %v622 = vpack.c.b16 %v590, %v590
      %v623 = vpack.c.b16 %v591, %v591
      %v624 = vpack.c.b16 %v592, %v592
      %v625 = vpack.c.b16 %v593, %v593
      %v626 = vpack.c.b16 %v594, %v594
      %v627 = vpack.c.b16 %v595, %v595
      %v628 = vpack.c.b16 %v596, %v596
      %v629 = vpack.c.b16 %v597, %v597
      %v630 = vpack.c.b16 %v598, %v598
      %v631 = vpack.c.b16 %v599, %v599
      %v632 = vpack.c.b16 %v600, %v600
      %v633 = vpack.c.b16 %v601, %v601
      %v634 = vpack.c.b16 %v602, %v602
      %667 = vst [vmem:[%s179] sm:$0xf] %v603
      %668 = vst [vmem:[%s179 + $0x4] sm:$0xf] %v604
      %669 = vst [vmem:[%s179 + $0x8] sm:$0xf] %v605
      %670 = vst [vmem:[%s179 + $0xc] sm:$0xf] %v606
      %671 = vst [vmem:[%s179 + $0x10] sm:$0xf] %v607
      %672 = vst [vmem:[%s179 + $0x14] sm:$0xf] %v608
      %673 = vst [vmem:[%s179 + $0x18] sm:$0xf] %v609
      %674 = vst [vmem:[%s179 + $0x1c] sm:$0xf] %v610
      %675 = vst [vmem:[%s179 + $0x20] sm:$0xf] %v611
      %676 = vst [vmem:[%s179 + $0x24] sm:$0xf] %v612
      %677 = vst [vmem:[%s179 + $0x28] sm:$0xf] %v613
      %678 = vst [vmem:[%s179 + $0x2c] sm:$0xf] %v614
      %679 = vst [vmem:[%s179 + $0x30] sm:$0xf] %v615
      %680 = vst [vmem:[%s179 + $0x34] sm:$0xf] %v616
      %681 = vst [vmem:[%s179 + $0x38] sm:$0xf] %v617
      %682 = vst [vmem:[%s179 + $0x3c] sm:$0xf] %v618
      %683 = vst [vmem:[%s179 + $0x40] sm:$0xf] %v619
      %684 = vst [vmem:[%s179 + $0x44] sm:$0xf] %v620
      %685 = vst [vmem:[%s179 + $0x48] sm:$0xf] %v621
      %686 = vst [vmem:[%s179 + $0x4c] sm:$0xf] %v622
      %687 = vst [vmem:[%s179 + $0x50] sm:$0xf] %v623
      %688 = vst [vmem:[%s179 + $0x54] sm:$0xf] %v624
      %689 = vst [vmem:[%s179 + $0x58] sm:$0xf] %v625
      %690 = vst [vmem:[%s179 + $0x5c] sm:$0xf] %v626
      %691 = vst [vmem:[%s179 + $0x60] sm:$0xf] %v627
      %692 = vst [vmem:[%s179 + $0x64] sm:$0xf] %v628
      %693 = vst [vmem:[%s179 + $0x68] sm:$0xf] %v629
      %694 = vst [vmem:[%s179 + $0x6c] sm:$0xf] %v630
      %695 = vst [vmem:[%s179 + $0x70] sm:$0xf] %v631
      %696 = vst [vmem:[%s179 + $0x74] sm:$0xf] %v632
      %697 = vst [vmem:[%s179 + $0x78] sm:$0xf] %v633
      %698 = vst [vmem:[%s179 + $0x7c] sm:$0xf] %v634
      %v699 = vadd.f32 %v413, %v416
      %v700 = vadd.f32 %v699, %v421
      %v701 = vadd.f32 %v700, %v424
      %v702 = vadd.f32 %v701, %v429
      %v703 = vadd.f32 %v702, %v432
      %v704 = vadd.f32 %v703, %v437
      %v705 = vadd.f32 %v704, %v440
      %v706 = vadd.f32 %v705, %v445
      %v707 = vadd.f32 %v706, %v448
      %v708 = vadd.f32 %v707, %v453
      %v709 = vadd.f32 %v708, %v456
      %v710 = vadd.f32 %v709, %v461
      %v711 = vadd.f32 %v710, %v464
      %v712 = vadd.f32 %v711, %v469
      %v713 = vadd.f32 %v712, %v472
      %v714 = vadd.f32 %v713, %v477
      %v715 = vadd.f32 %v714, %v480
      %v716 = vadd.f32 %v715, %v485
      %v717 = vadd.f32 %v716, %v488
      %v718 = vadd.f32 %v717, %v493
      %v719 = vadd.f32 %v718, %v496
      %v720 = vadd.f32 %v719, %v501
      %v721 = vadd.f32 %v720, %v504
      %v722 = vadd.f32 %v721, %v509
      %v723 = vadd.f32 %v722, %v512
      %v724 = vadd.f32 %v723, %v517
      %v725 = vadd.f32 %v724, %v520
      %v726 = vadd.f32 %v725, %v525
      %v727 = vadd.f32 %v726, %v528
      %v728 = vadd.f32 %v727, %v533
      %v729 = vadd.f32 %v728, %v536
      %v730 = vrot.slane %v729, 4
      %v731 = vadd.f32 %v729, %v730
      %v732 = vrot.slane %v731, 2
      %v733 = vadd.f32 %v731, %v732
      %v734 = vrot.slane %v733, 1
      %v735 = vadd.f32 %v733, %v734
      %v736 = vmul.f32 %v413, %v413
      %v737 = vmul.f32 %v416, %v416
      %v738 = vmul.f32 %v421, %v421
      %v739 = vmul.f32 %v424, %v424
      %v740 = vmul.f32 %v429, %v429
      %v741 = vmul.f32 %v432, %v432
      %v742 = vmul.f32 %v437, %v437
      %v743 = vmul.f32 %v440, %v440
      %v744 = vmul.f32 %v445, %v445
      %v745 = vmul.f32 %v448, %v448
      %v746 = vmul.f32 %v453, %v453
      %v747 = vmul.f32 %v456, %v456
      %v748 = vmul.f32 %v461, %v461
      %v749 = vmul.f32 %v464, %v464
      %v750 = vmul.f32 %v469, %v469
      %v751 = vmul.f32 %v472, %v472
      %v752 = vmul.f32 %v477, %v477
      %v753 = vmul.f32 %v480, %v480
      %v754 = vmul.f32 %v485, %v485
      %v755 = vmul.f32 %v488, %v488
      %v756 = vmul.f32 %v493, %v493
      %v757 = vmul.f32 %v496, %v496
      %v758 = vmul.f32 %v501, %v501
      %v759 = vmul.f32 %v504, %v504
      %v760 = vmul.f32 %v509, %v509
      %v761 = vmul.f32 %v512, %v512
      %v762 = vmul.f32 %v517, %v517
      %v763 = vmul.f32 %v520, %v520
      %v764 = vmul.f32 %v525, %v525
      %v765 = vmul.f32 %v528, %v528
      %v766 = vmul.f32 %v533, %v533
      %v767 = vmul.f32 %v536, %v536
      %v768 = vadd.f32 %v736, %v737
      %v769 = vadd.f32 %v768, %v738
      %v770 = vadd.f32 %v769, %v739
      %v771 = vadd.f32 %v770, %v740
      %v772 = vadd.f32 %v771, %v741
      %v773 = vadd.f32 %v772, %v742
      %v774 = vadd.f32 %v773, %v743
      %v775 = vadd.f32 %v774, %v744
      %v776 = vadd.f32 %v775, %v745
      %v777 = vadd.f32 %v776, %v746
      %v778 = vadd.f32 %v777, %v747
      %v779 = vadd.f32 %v778, %v748
      %v780 = vadd.f32 %v779, %v749
      %v781 = vadd.f32 %v780, %v750
      %v782 = vadd.f32 %v781, %v751
      %v783 = vadd.f32 %v782, %v752
      %v784 = vadd.f32 %v783, %v753
      %v785 = vadd.f32 %v784, %v754
      %v786 = vadd.f32 %v785, %v755
      %v787 = vadd.f32 %v786, %v756
      %v788 = vadd.f32 %v787, %v757
      %v789 = vadd.f32 %v788, %v758
      %v790 = vadd.f32 %v789, %v759
      %v791 = vadd.f32 %v790, %v760
      %v792 = vadd.f32 %v791, %v761
      %v793 = vadd.f32 %v792, %v762
      %v794 = vadd.f32 %v793, %v763
      %v795 = vadd.f32 %v794, %v764
      %v796 = vadd.f32 %v795, %v765
      %v797 = vadd.f32 %v796, %v766
      %v798 = vadd.f32 %v797, %v767
      %v799 = vrot.slane %v798, 4
      %v800 = vadd.f32 %v798, %v799
      %v801 = vrot.slane %v800, 2
      %v802 = vadd.f32 %v800, %v801
      %v803 = vrot.slane %v802, 1
      %v804 = vadd.f32 %v802, %v803
      %vm805 = vcmask 1040384
      %v806 = vsel %vm805, %v735, %v804
      %vm807 = vcmask 1041408
      %v808 = vsel %vm807, %v806, 0.0
      %809 = vst [vmem:[%s184] sm:$0xff] %v808
      %s810 = smul.u32 32, %s15
      %p811 = scmp.lt.s32.totalorder %s810, 63
      %s812 = scalar_select %p811, %s810, 63
      %s813 = smul.addr %s812, 4
      %s814 = scalar_lea.vmem %s2, %s813
      %p815 = scmp.lt.s32.totalorder %s15, 1
      %s816 = scalar_select %p815, %s15, 1
      %s817 = smul.addr %s816, 8
      %s818 = scalar_lea.vmem %s3, %s817
      // Predicated region
      $region29: #{double_conv.2} parent=27 // pred_check
        %p819 = pneg %p80
      $region30: #{double_conv.2} parent=27 // pred_check_branch
        %821 = sbr.rel (%p819) target = $region32
      $region31: #{double_conv.2} parent=27 // pred_region
        %s822 = smul.u32 32, %s15
      $region32: #{double_conv.2} parent=27 // pred_fallthru
        _
      // Predicated region
      $region33: #{double_conv.2} parent=27 // pred_check
        %p823 = pneg %p106
      $region34: #{double_conv.2} parent=27 // pred_check_branch
        %825 = sbr.rel (%p823) target = $region36
      $region35: #{double_conv.2} parent=27 // pred_region
        _
      $region36: #{double_conv.2} parent=27 // pred_fallthru
        _
    $region28: #{double_conv.2} parent=5 // pred_fallthru
      _
    %p826 = scmp.le.s32.totalorder 2, %s10
    // Predicated region
    $region37: #{double_conv.2} parent=5 // pred_check
      %p827 = pneg %p826
    $region38: #{double_conv.2} parent=5 // pred_check_branch
      %829 = sbr.rel (%p827) target = $region40
    $region39: #{double_conv.2} parent=5 // pred_region
      %s830 = ssub.s32 %s10, 2
      // Predicated region
      $region41: #{double_conv.2} parent=39 // pred_check
        %p831 = pneg %p86
      $region42: #{double_conv.2} parent=39 // pred_check_branch
        %833 = sbr.rel (%p831) target = $region44
      $region43: #{double_conv.2} parent=39 // pred_region
        %s834 = smul.u32 32, %s16
        %p835 = scmp.lt.s32.totalorder %s834, 63
        %s836 = scalar_select %p835, %s834, 63
        %s837 = smul.addr %s836, 4
        %s838 = scalar_lea.vmem %s2, %s837
      $region44: #{double_conv.2} parent=39 // pred_fallthru
        _
      // Predicated region
      $region45: #{double_conv.2} parent=39 // pred_check
        %p839 = pneg %p112
      $region46: #{double_conv.2} parent=39 // pred_check_branch
        %841 = sbr.rel (%p839) target = $region48
      $region47: #{double_conv.2} parent=39 // pred_region
        %p842 = scmp.lt.s32.totalorder %s16, 1
        %s843 = scalar_select %p842, %s16, 1
        %s844 = smul.addr %s843, 8
        %s845 = scalar_lea.vmem %s3, %s844
      $region48: #{double_conv.2} parent=39 // pred_fallthru
        _
    $region40: #{double_conv.2} parent=5 // pred_fallthru
      _
  $region6: #{double_conv.2} parent=0 // loop_footer
    %s14 = sadd.s32 1, %s10
  $region7: #{double_conv.2} parent=0 // loop_footer_branch
    %9 = sbr.rel target = $region3
  $region8: #{double_conv.2} parent=0 // loop_exit
    _

</llo_original>
